<compile_context>
chip_gen: v5e
topology: v5e:2x2
jax: 0.10.0
libtpu: 0.0.40
codegen_flags: <defaults>
</compile_context>

<pallas_src>
import math
import functools

import jax
import jax.numpy as jnp
from jax.experimental import pallas as pl
from jax.experimental.pallas import tpu as pltpu


def _attention_kernel(xq_ref, xkv_ref, wq_ref, wk_ref, wv_ref, wo_ref, o_ref,
                      q_scr, m_scr, l_scr, acc_scr, *, n_head):
    # xq_ref: (tq, C) bf16   xkv_ref: (tk, C) bf16   w*_ref: (C, C) bf16
    # o_ref:  (tq, C) out dtype
    # q_scr:  (nh, tq, hs) bf16   m_scr/l_scr: (nh, tq, 1) f32
    # acc_scr:(nh, tq, hs) f32
    ki = pl.program_id(2)
    nk = pl.num_programs(2)

    tq, C = xq_ref.shape
    hs = C // n_head
    inv_sqrt_hs = 1.0 / math.sqrt(hs)

    def split_heads(y2d):  # (t, C) f32 -> (nh, t, hs) f32, static lane slices
        return jnp.stack([y2d[:, h * hs:(h + 1) * hs] for h in range(n_head)],
                         axis=0)

    # ---- first kv step for this (batch, q-tile): project q, reset stats ----
    @pl.when(ki == 0)
    def _init():
        qp = jnp.dot(xq_ref[...], wq_ref[...],
                     preferred_element_type=jnp.float32)          # (tq, C) f32
        qp = qp * inv_sqrt_hs                                     # fold scale once
        q_scr[...] = split_heads(qp).astype(jnp.bfloat16)         # (nh, tq, hs)
        m_scr[...] = jnp.full_like(m_scr, -jnp.inf)
        l_scr[...] = jnp.zeros_like(l_scr)
        acc_scr[...] = jnp.zeros_like(acc_scr)

    # ---- project this kv tile (bf16 operands, f32 accumulation) ----
    xkv = xkv_ref[...]                                            # (tk, C) bf16
    kp = jnp.dot(xkv, wk_ref[...], preferred_element_type=jnp.float32)
    vp = jnp.dot(xkv, wv_ref[...], preferred_element_type=jnp.float32)
    k_h = split_heads(kp).astype(jnp.bfloat16)                    # (nh, tk, hs)
    v_h = split_heads(vp).astype(jnp.bfloat16)                    # (nh, tk, hs)

    # ---- batched score over heads; NO mask (see module-level note) ----
    s = jnp.einsum('nqd,nkd->nqk', q_scr[...], k_h,
                   preferred_element_type=jnp.float32)            # (nh, tq, tk)

    # ---- online softmax update ----
    m_prev = m_scr[...]
    m_new = jnp.maximum(m_prev, jnp.max(s, axis=-1, keepdims=True))
    alpha = jnp.exp(m_prev - m_new)
    p = jnp.exp(s - m_new)
    l_scr[...] = alpha * l_scr[...] + jnp.sum(p, axis=-1, keepdims=True)
    acc_scr[...] = alpha * acc_scr[...] + jnp.einsum(
        'nqk,nkd->nqd', p.astype(jnp.bfloat16), v_h,
        preferred_element_type=jnp.float32)                       # (nh, tq, hs)
    m_scr[...] = m_new

    # ---- last kv step: normalise, merge heads, final projection, store ----
    @pl.when(ki == nk - 1)
    def _finalize():
        o = acc_scr[...] * pl.reciprocal(l_scr[...], approx=True)  # (nh, tq, hs)
        o_merged = jnp.concatenate([o[h] for h in range(n_head)], axis=-1)  # (tq, C)
        out = jnp.dot(o_merged.astype(jnp.bfloat16), wo_ref[...],
                      preferred_element_type=jnp.float32)          # (tq, C)
        # attn_drop: eval-mode dropout == identity.
        o_ref[...] = out.astype(o_ref.dtype)


def _pick_tile(T):
    for c in (128, 64, 32, 16, 8):
        if T % c == 0:
            return c
    return T  # full-dim block (allowed when it equals the array dim)


def attention_forward(x, wk_t, wq_t, wv_t, wo_t, n_head, *, tq=None, tk=None):
    """x: (B, T, C); w*_t: (C, C) pre-transposed nn.Linear weights (in, out)."""
    B, T, C = x.shape
    assert C % n_head == 0
    hs = C // n_head
    tq = _pick_tile(T) if tq is None else tq
    tk = _pick_tile(T) if tk is None else tk
    assert T % tq == 0 and T % tk == 0

    out_dtype = x.dtype
    # bf16 operands for the MXU (and half the weight/x DMA bytes); all
    # accumulation / softmax statistics stay f32 inside the kernel.
    xb = x.astype(jnp.bfloat16)
    wq_b = wq_t.astype(jnp.bfloat16)
    wk_b = wk_t.astype(jnp.bfloat16)
    wv_b = wv_t.astype(jnp.bfloat16)
    wo_b = wo_t.astype(jnp.bfloat16)

    kernel = functools.partial(_attention_kernel, n_head=n_head)
    grid = (B, T // tq, T // tk)

    return pl.pallas_call(
        kernel,
        out_shape=jax.ShapeDtypeStruct((B, T, C), out_dtype),
        grid_spec=pltpu.PrefetchScalarGridSpec(
            num_scalar_prefetch=0,
            grid=grid,
            in_specs=[
                # x for the q rows of this tile (constant across kv axis).
                pl.BlockSpec((pl.Squeezed(), tq, C), lambda b, qi, ki: (b, qi, 0)),
                # x for the kv rows of this tile.
                pl.BlockSpec((pl.Squeezed(), tk, C), lambda b, qi, ki: (b, ki, 0)),
                pl.BlockSpec((C, C), lambda b, qi, ki: (0, 0)),   # Wq^T
                pl.BlockSpec((C, C), lambda b, qi, ki: (0, 0)),   # Wk^T
                pl.BlockSpec((C, C), lambda b, qi, ki: (0, 0)),   # Wv^T
                pl.BlockSpec((C, C), lambda b, qi, ki: (0, 0)),   # Wo^T
            ],
            out_specs=pl.BlockSpec((pl.Squeezed(), tq, C),
                                   lambda b, qi, ki: (b, qi, 0)),
            scratch_shapes=[
                pltpu.VMEM((n_head, tq, hs), jnp.bfloat16),   # scaled q per head
                pltpu.VMEM((n_head, tq, 1), jnp.float32),     # running max
                pltpu.VMEM((n_head, tq, 1), jnp.float32),     # running denom
                pltpu.VMEM((n_head, tq, hs), jnp.float32),    # output accumulator
            ],
        ),
        compiler_params=pltpu.CompilerParams(
            dimension_semantics=("parallel", "parallel", "arbitrary"),
            vmem_limit_bytes=32 * 1024 * 1024,
        ),
    )(xb, xb, wq_b, wk_b, wv_b, wo_b)


def attention_reference(x, wk_t, wq_t, wv_t, wo_t, n_head):
    """Plain-JAX (f32) reference mirroring the PyTorch forward (dot attn, no mask)."""
    B, T, C = x.shape
    hs = C // n_head

    def split_heads(y):  # (B,T,C) -> (B,nh,T,hs)
        return y.reshape(B, T, n_head, hs).transpose(0, 2, 1, 3)

    k = split_heads(x @ wk_t)
    q = split_heads(x @ wq_t)
    v = split_heads(x @ wv_t)
    score = jnp.einsum('bhqd,bhkd->bhqk', q, k) / math.sqrt(hs)
    e = jax.nn.softmax(score, axis=-1)
    o = jnp.einsum('bhqk,bhkd->bhqd', e, v)
    o = o.transpose(0, 2, 1, 3).reshape(B, T, C)
    return o @ wo_t


if __name__ == "__main__":
    # Small shapes consistent with the module (emb_dim == value_dim == query_dim,
    # required by the .view(B, T, n_head, C // n_head) in the PyTorch forward).
    B, T, C = 2, 16, 32
    n_head = 4

    key = jax.random.PRNGKey(0)
    kx, kk, kq, kv, ko = jax.random.split(key, 5)

    x = jax.random.normal(kx, (B, T, C), dtype=jnp.float32)
    # nn.Linear(C, C, bias=False) weight is (out, in); pass its transpose (in, out).
    scale = 1.0 / math.sqrt(C)
    wk_t = jax.random.uniform(kk, (C, C), jnp.float32, -scale, scale)
    wq_t = jax.random.uniform(kq, (C, C), jnp.float32, -scale, scale)
    wv_t = jax.random.uniform(kv, (C, C), jnp.float32, -scale, scale)
    wo_t = jax.random.uniform(ko, (C, C), jnp.float32, -scale, scale)

    # tq=tk=8 so the (B=2) x (2 q-tiles) x (2 kv-tiles) grid actually exercises
    # the online-softmax accumulation across multiple kv steps.
    out = attention_forward(x, wk_t, wq_t, wv_t, wo_t, n_head, tq=8, tk=8)
    out = jax.block_until_ready(out)

    ref = attention_reference(x, wk_t, wq_t, wv_t, wo_t, n_head)
    assert out.shape == (B, T, C)
    # bf16 MXU operands (f32 accumulation) -> compare with bf16-level tolerance.
    assert jnp.allclose(out, ref, atol=2.5e-2, rtol=2.5e-2), "mismatch vs reference"

    # TODO(synk): 'additive' / 'multiplicative' att_type branches, compress=True,
    # and training-mode dropout are not exercised by the default forward and are
    # not implemented.
    print("KERNEL_OK")
</pallas_src>

<mosaic_0001>
module attributes {stable_mosaic.version = 11 : i64} {
  func.func @_attention_kernel(%arg0: i32, %arg1: i32, %arg2: i32, %arg3: memref<1x8x32xbf16, #tpu.memory_space<vmem>>, %arg4: memref<1x8x32xbf16, #tpu.memory_space<vmem>>, %arg5: memref<32x32xbf16, #tpu.memory_space<vmem>>, %arg6: memref<32x32xbf16, #tpu.memory_space<vmem>>, %arg7: memref<32x32xbf16, #tpu.memory_space<vmem>>, %arg8: memref<32x32xbf16, #tpu.memory_space<vmem>>, %arg9: memref<1x8x32xf32, #tpu.memory_space<vmem>>, %arg10: memref<4x8x8xbf16, #tpu.memory_space<vmem>>, %arg11: memref<4x8x1xf32, #tpu.memory_space<vmem>>, %arg12: memref<4x8x1xf32, #tpu.memory_space<vmem>>, %arg13: memref<4x8x8xf32, #tpu.memory_space<vmem>>) attributes {dimension_semantics = [#tpu.dimension_semantics<parallel>, #tpu.dimension_semantics<parallel>, #tpu.dimension_semantics<arbitrary>], iteration_bounds = array<i64: 2, 2, 2>, scalar_prefetch = 0 : i64, scratch_operands = 4 : i64, tpu.core_type = #tpu.core_type<tc>, window_params = [{transform_indices = @transform_0, window_bounds = array<i64: 1, 8, 32>}, {transform_indices = @transform_1, window_bounds = array<i64: 1, 8, 32>}, {pipeline_mode = #tpu.pipeline_mode<synchronous>, transform_indices = @transform_2, window_bounds = array<i64: 32, 32>}, {pipeline_mode = #tpu.pipeline_mode<synchronous>, transform_indices = @transform_3, window_bounds = array<i64: 32, 32>}, {pipeline_mode = #tpu.pipeline_mode<synchronous>, transform_indices = @transform_4, window_bounds = array<i64: 32, 32>}, {pipeline_mode = #tpu.pipeline_mode<synchronous>, transform_indices = @transform_5, window_bounds = array<i64: 32, 32>}, {transform_indices = @transform_6, window_bounds = array<i64: 1, 8, 32>}]} {
    %c0_i32 = arith.constant 0 : i32
    %0 = arith.cmpi eq, %arg2, %c0_i32 : i32
    %1 = arith.extui %0 : i1 to i32
    %c0_i32_0 = arith.constant 0 : i32
    %2 = arith.cmpi ne, %1, %c0_i32_0 : i32
    scf.if %2 {
      %c0_34 = arith.constant 0 : index
      %c0_35 = arith.constant 0 : index
      %c0_36 = arith.constant 0 : index
      %57 = vector.load %arg3[%c0_34, %c0_35, %c0_36] : memref<1x8x32xbf16, #tpu.memory_space<vmem>>, vector<1x8x32xbf16>
      %58 = vector.shape_cast %57 : vector<1x8x32xbf16> to vector<8x32xbf16>
      %c0_37 = arith.constant 0 : index
      %c0_38 = arith.constant 0 : index
      %59 = vector.load %arg5[%c0_37, %c0_38] : memref<32x32xbf16, #tpu.memory_space<vmem>>, vector<32x32xbf16>
      %cst_39 = arith.constant dense<0.000000e+00> : vector<8x32xf32>
      %60 = tpu.matmul %58, %59, %cst_39 {dimension_numbers = #tpu.dot_dimension_numbers<[1], [0], [0], [1], [0, 0, 1, 1], [], []>} : vector<8x32xbf16>, vector<32x32xbf16>, vector<8x32xf32> -> vector<8x32xf32>
      %cst_40 = arith.constant 0.353553385 : f32
      %61 = vector.broadcast %cst_40 : f32 to vector<8x32xf32>
      %62 = arith.mulf %60, %61 : vector<8x32xf32>
      %63 = vector.extract_strided_slice %62 {offsets = [0, 0], sizes = [8, 8], strides = [1, 1]} : vector<8x32xf32> to vector<8x8xf32>
      %64 = vector.extract_strided_slice %62 {offsets = [0, 8], sizes = [8, 8], strides = [1, 1]} : vector<8x32xf32> to vector<8x8xf32>
      %65 = vector.extract_strided_slice %62 {offsets = [0, 16], sizes = [8, 8], strides = [1, 1]} : vector<8x32xf32> to vector<8x8xf32>
      %66 = vector.extract_strided_slice %62 {offsets = [0, 24], sizes = [8, 8], strides = [1, 1]} : vector<8x32xf32> to vector<8x8xf32>
      %67 = vector.shape_cast %63 : vector<8x8xf32> to vector<1x8x8xf32>
      %68 = vector.shape_cast %64 : vector<8x8xf32> to vector<1x8x8xf32>
      %69 = vector.shape_cast %65 : vector<8x8xf32> to vector<1x8x8xf32>
      %70 = vector.shape_cast %66 : vector<8x8xf32> to vector<1x8x8xf32>
      %71 = tpu.concatenate %67, %68, %69, %70 in 0 : vector<1x8x8xf32>, vector<1x8x8xf32>, vector<1x8x8xf32>, vector<1x8x8xf32> -> vector<4x8x8xf32>
      %72 = arith.truncf %71 : vector<4x8x8xf32> to vector<4x8x8xbf16>
      %c0_41 = arith.constant 0 : index
      %c0_42 = arith.constant 0 : index
      %c0_43 = arith.constant 0 : index
      %73 = vector.load %arg10[%c0_41, %c0_42, %c0_43] : memref<4x8x8xbf16, #tpu.memory_space<vmem>>, vector<4x8x8xbf16>
      tpu.vector_store %arg10[%c0_41, %c0_42, %c0_43], %72 {strides = array<i32>} : memref<4x8x8xbf16, #tpu.memory_space<vmem>>, vector<4x8x8xbf16>,
      %cst_44 = arith.constant 0xFF800000 : f32
      %74 = vector.broadcast %cst_44 : f32 to vector<4x8x1xf32>
      %c0_45 = arith.constant 0 : index
      %c0_46 = arith.constant 0 : index
      %c0_47 = arith.constant 0 : index
      %75 = vector.load %arg11[%c0_45, %c0_46, %c0_47] : memref<4x8x1xf32, #tpu.memory_space<vmem>>, vector<4x8x1xf32>
      tpu.vector_store %arg11[%c0_45, %c0_46, %c0_47], %74 {strides = array<i32>} : memref<4x8x1xf32, #tpu.memory_space<vmem>>, vector<4x8x1xf32>,
      %cst_48 = arith.constant 0.000000e+00 : f32
      %76 = vector.broadcast %cst_48 : f32 to vector<4x8x1xf32>
      %c0_49 = arith.constant 0 : index
      %c0_50 = arith.constant 0 : index
      %c0_51 = arith.constant 0 : index
      %77 = vector.load %arg12[%c0_49, %c0_50, %c0_51] : memref<4x8x1xf32, #tpu.memory_space<vmem>>, vector<4x8x1xf32>
      tpu.vector_store %arg12[%c0_49, %c0_50, %c0_51], %76 {strides = array<i32>} : memref<4x8x1xf32, #tpu.memory_space<vmem>>, vector<4x8x1xf32>,
      %cst_52 = arith.constant 0.000000e+00 : f32
      %78 = vector.broadcast %cst_52 : f32 to vector<4x8x8xf32>
      %c0_53 = arith.constant 0 : index
      %c0_54 = arith.constant 0 : index
      %c0_55 = arith.constant 0 : index
      %79 = vector.load %arg13[%c0_53, %c0_54, %c0_55] : memref<4x8x8xf32, #tpu.memory_space<vmem>>, vector<4x8x8xf32>
      tpu.vector_store %arg13[%c0_53, %c0_54, %c0_55], %78 {strides = array<i32>} : memref<4x8x8xf32, #tpu.memory_space<vmem>>, vector<4x8x8xf32>,
    } else {
    }
    %c0 = arith.constant 0 : index
    %c0_1 = arith.constant 0 : index
    %c0_2 = arith.constant 0 : index
    %3 = vector.load %arg4[%c0, %c0_1, %c0_2] : memref<1x8x32xbf16, #tpu.memory_space<vmem>>, vector<1x8x32xbf16>
    %4 = vector.shape_cast %3 : vector<1x8x32xbf16> to vector<8x32xbf16>
    %c0_3 = arith.constant 0 : index
    %c0_4 = arith.constant 0 : index
    %5 = vector.load %arg6[%c0_3, %c0_4] : memref<32x32xbf16, #tpu.memory_space<vmem>>, vector<32x32xbf16>
    %cst = arith.constant dense<0.000000e+00> : vector<8x32xf32>
    %6 = tpu.matmul %4, %5, %cst {dimension_numbers = #tpu.dot_dimension_numbers<[1], [0], [0], [1], [0, 0, 1, 1], [], []>} : vector<8x32xbf16>, vector<32x32xbf16>, vector<8x32xf32> -> vector<8x32xf32>
    %c0_5 = arith.constant 0 : index
    %c0_6 = arith.constant 0 : index
    %7 = vector.load %arg7[%c0_5, %c0_6] : memref<32x32xbf16, #tpu.memory_space<vmem>>, vector<32x32xbf16>
    %cst_7 = arith.constant dense<0.000000e+00> : vector<8x32xf32>
    %8 = tpu.matmul %4, %7, %cst_7 {dimension_numbers = #tpu.dot_dimension_numbers<[1], [0], [0], [1], [0, 0, 1, 1], [], []>} : vector<8x32xbf16>, vector<32x32xbf16>, vector<8x32xf32> -> vector<8x32xf32>
    %9 = vector.extract_strided_slice %6 {offsets = [0, 0], sizes = [8, 8], strides = [1, 1]} : vector<8x32xf32> to vector<8x8xf32>
    %10 = vector.extract_strided_slice %6 {offsets = [0, 8], sizes = [8, 8], strides = [1, 1]} : vector<8x32xf32> to vector<8x8xf32>
    %11 = vector.extract_strided_slice %6 {offsets = [0, 16], sizes = [8, 8], strides = [1, 1]} : vector<8x32xf32> to vector<8x8xf32>
    %12 = vector.extract_strided_slice %6 {offsets = [0, 24], sizes = [8, 8], strides = [1, 1]} : vector<8x32xf32> to vector<8x8xf32>
    %13 = vector.shape_cast %9 : vector<8x8xf32> to vector<1x8x8xf32>
    %14 = vector.shape_cast %10 : vector<8x8xf32> to vector<1x8x8xf32>
    %15 = vector.shape_cast %11 : vector<8x8xf32> to vector<1x8x8xf32>
    %16 = vector.shape_cast %12 : vector<8x8xf32> to vector<1x8x8xf32>
    %17 = tpu.concatenate %13, %14, %15, %16 in 0 : vector<1x8x8xf32>, vector<1x8x8xf32>, vector<1x8x8xf32>, vector<1x8x8xf32> -> vector<4x8x8xf32>
    %18 = arith.truncf %17 : vector<4x8x8xf32> to vector<4x8x8xbf16>
    %19 = vector.extract_strided_slice %8 {offsets = [0, 0], sizes = [8, 8], strides = [1, 1]} : vector<8x32xf32> to vector<8x8xf32>
    %20 = vector.extract_strided_slice %8 {offsets = [0, 8], sizes = [8, 8], strides = [1, 1]} : vector<8x32xf32> to vector<8x8xf32>
    %21 = vector.extract_strided_slice %8 {offsets = [0, 16], sizes = [8, 8], strides = [1, 1]} : vector<8x32xf32> to vector<8x8xf32>
    %22 = vector.extract_strided_slice %8 {offsets = [0, 24], sizes = [8, 8], strides = [1, 1]} : vector<8x32xf32> to vector<8x8xf32>
    %23 = vector.shape_cast %19 : vector<8x8xf32> to vector<1x8x8xf32>
    %24 = vector.shape_cast %20 : vector<8x8xf32> to vector<1x8x8xf32>
    %25 = vector.shape_cast %21 : vector<8x8xf32> to vector<1x8x8xf32>
    %26 = vector.shape_cast %22 : vector<8x8xf32> to vector<1x8x8xf32>
    %27 = tpu.concatenate %23, %24, %25, %26 in 0 : vector<1x8x8xf32>, vector<1x8x8xf32>, vector<1x8x8xf32>, vector<1x8x8xf32> -> vector<4x8x8xf32>
    %28 = arith.truncf %27 : vector<4x8x8xf32> to vector<4x8x8xbf16>
    %c0_8 = arith.constant 0 : index
    %c0_9 = arith.constant 0 : index
    %c0_10 = arith.constant 0 : index
    %29 = vector.load %arg10[%c0_8, %c0_9, %c0_10] : memref<4x8x8xbf16, #tpu.memory_space<vmem>>, vector<4x8x8xbf16>
    "tpu.trace_start"() <{level = 10 : i32, message = "nqd,nkd->nqk"}> : () -> ()
    %cst_11 = arith.constant dense<0.000000e+00> : vector<4x8x8xf32>
    %30 = tpu.matmul %29, %18, %cst_11 {dimension_numbers = #tpu.dot_dimension_numbers<[2], [2], [1], [1], [0, 0, 0, 1, 1, 1], [0], [0]>} : vector<4x8x8xbf16>, vector<4x8x8xbf16>, vector<4x8x8xf32> -> vector<4x8x8xf32>
    "tpu.trace_stop"() : () -> ()
    %c0_12 = arith.constant 0 : index
    %c0_13 = arith.constant 0 : index
    %c0_14 = arith.constant 0 : index
    %31 = vector.load %arg11[%c0_12, %c0_13, %c0_14] : memref<4x8x1xf32, #tpu.memory_space<vmem>>, vector<4x8x1xf32>
    %cst_15 = arith.constant dense<0xFF800000> : vector<4x8xf32>
    %32 = vector.multi_reduction <maximumf>, %30, %cst_15 [2] : vector<4x8x8xf32> to vector<4x8xf32>
    %33 = vector.shape_cast %32 : vector<4x8xf32> to vector<4x8x1xf32>
    %34 = arith.maximumf %31, %33 : vector<4x8x1xf32>
    %35 = arith.subf %31, %34 : vector<4x8x1xf32>
    %36 = math.exp %35 : vector<4x8x1xf32>
    %37 = vector.broadcast %34 : vector<4x8x1xf32> to vector<4x8x8xf32>
    %38 = arith.subf %30, %37 : vector<4x8x8xf32>
    %39 = math.exp %38 : vector<4x8x8xf32>
    %c0_16 = arith.constant 0 : index
    %c0_17 = arith.constant 0 : index
    %c0_18 = arith.constant 0 : index
    %40 = vector.load %arg12[%c0_16, %c0_17, %c0_18] : memref<4x8x1xf32, #tpu.memory_space<vmem>>, vector<4x8x1xf32>
    %41 = arith.mulf %36, %40 : vector<4x8x1xf32>
    %cst_19 = arith.constant dense<0.000000e+00> : vector<4x8xf32>
    %42 = vector.multi_reduction <add>, %39, %cst_19 [2] : vector<4x8x8xf32> to vector<4x8xf32>
    %43 = vector.shape_cast %42 : vector<4x8xf32> to vector<4x8x1xf32>
    %44 = arith.addf %41, %43 : vector<4x8x1xf32>
    %c0_20 = arith.constant 0 : index
    %c0_21 = arith.constant 0 : index
    %c0_22 = arith.constant 0 : index
    %45 = vector.load %arg12[%c0_20, %c0_21, %c0_22] : memref<4x8x1xf32, #tpu.memory_space<vmem>>, vector<4x8x1xf32>
    tpu.vector_store %arg12[%c0_20, %c0_21, %c0_22], %44 {strides = array<i32>} : memref<4x8x1xf32, #tpu.memory_space<vmem>>, vector<4x8x1xf32>,
    %c0_23 = arith.constant 0 : index
    %c0_24 = arith.constant 0 : index
    %c0_25 = arith.constant 0 : index
    %46 = vector.load %arg13[%c0_23, %c0_24, %c0_25] : memref<4x8x8xf32, #tpu.memory_space<vmem>>, vector<4x8x8xf32>
    %47 = vector.broadcast %36 : vector<4x8x1xf32> to vector<4x8x8xf32>
    %48 = arith.mulf %47, %46 : vector<4x8x8xf32>
    %49 = arith.truncf %39 : vector<4x8x8xf32> to vector<4x8x8xbf16>
    "tpu.trace_start"() <{level = 10 : i32, message = "nqk,nkd->nqd"}> : () -> ()
    %cst_26 = arith.constant dense<0.000000e+00> : vector<4x8x8xf32>
    %50 = tpu.matmul %49, %28, %cst_26 {dimension_numbers = #tpu.dot_dimension_numbers<[2], [1], [1], [2], [0, 0, 0, 1, 1, 2], [0], [0]>} : vector<4x8x8xbf16>, vector<4x8x8xbf16>, vector<4x8x8xf32> -> vector<4x8x8xf32>
    "tpu.trace_stop"() : () -> ()
    %51 = arith.addf %48, %50 : vector<4x8x8xf32>
    %c0_27 = arith.constant 0 : index
    %c0_28 = arith.constant 0 : index
    %c0_29 = arith.constant 0 : index
    %52 = vector.load %arg13[%c0_27, %c0_28, %c0_29] : memref<4x8x8xf32, #tpu.memory_space<vmem>>, vector<4x8x8xf32>
    tpu.vector_store %arg13[%c0_27, %c0_28, %c0_29], %51 {strides = array<i32>} : memref<4x8x8xf32, #tpu.memory_space<vmem>>, vector<4x8x8xf32>,
    %c0_30 = arith.constant 0 : index
    %c0_31 = arith.constant 0 : index
    %c0_32 = arith.constant 0 : index
    %53 = vector.load %arg11[%c0_30, %c0_31, %c0_32] : memref<4x8x1xf32, #tpu.memory_space<vmem>>, vector<4x8x1xf32>
    tpu.vector_store %arg11[%c0_30, %c0_31, %c0_32], %34 {strides = array<i32>} : memref<4x8x1xf32, #tpu.memory_space<vmem>>, vector<4x8x1xf32>,
    %c1_i32 = arith.constant 1 : i32
    %54 = arith.cmpi eq, %arg2, %c1_i32 : i32
    %55 = arith.extui %54 : i1 to i32
    %c0_i32_33 = arith.constant 0 : i32
    %56 = arith.cmpi ne, %55, %c0_i32_33 : i32
    scf.if %56 {
      %c0_34 = arith.constant 0 : index
      %c0_35 = arith.constant 0 : index
      %c0_36 = arith.constant 0 : index
      %57 = vector.load %arg13[%c0_34, %c0_35, %c0_36] : memref<4x8x8xf32, #tpu.memory_space<vmem>>, vector<4x8x8xf32>
      %c0_37 = arith.constant 0 : index
      %c0_38 = arith.constant 0 : index
      %c0_39 = arith.constant 0 : index
      %58 = vector.load %arg12[%c0_37, %c0_38, %c0_39] : memref<4x8x1xf32, #tpu.memory_space<vmem>>, vector<4x8x1xf32>
      %59 = tpu.reciprocal %58 {approx = true} : vector<4x8x1xf32> -> vector<4x8x1xf32>
      %60 = vector.broadcast %59 : vector<4x8x1xf32> to vector<4x8x8xf32>
      %61 = arith.mulf %57, %60 : vector<4x8x8xf32>
      %62 = vector.extract_strided_slice %61 {offsets = [0, 0, 0], sizes = [1, 8, 8], strides = [1, 1, 1]} : vector<4x8x8xf32> to vector<1x8x8xf32>
      %63 = vector.shape_cast %62 : vector<1x8x8xf32> to vector<8x8xf32>
      %64 = vector.extract_strided_slice %61 {offsets = [1, 0, 0], sizes = [1, 8, 8], strides = [1, 1, 1]} : vector<4x8x8xf32> to vector<1x8x8xf32>
      %65 = vector.shape_cast %64 : vector<1x8x8xf32> to vector<8x8xf32>
      %66 = vector.extract_strided_slice %61 {offsets = [2, 0, 0], sizes = [1, 8, 8], strides = [1, 1, 1]} : vector<4x8x8xf32> to vector<1x8x8xf32>
      %67 = vector.shape_cast %66 : vector<1x8x8xf32> to vector<8x8xf32>
      %68 = vector.extract_strided_slice %61 {offsets = [3, 0, 0], sizes = [1, 8, 8], strides = [1, 1, 1]} : vector<4x8x8xf32> to vector<1x8x8xf32>
      %69 = vector.shape_cast %68 : vector<1x8x8xf32> to vector<8x8xf32>
      %70 = tpu.concatenate %63, %65, %67, %69 in 1 : vector<8x8xf32>, vector<8x8xf32>, vector<8x8xf32>, vector<8x8xf32> -> vector<8x32xf32>
      %71 = arith.truncf %70 : vector<8x32xf32> to vector<8x32xbf16>
      %c0_40 = arith.constant 0 : index
      %c0_41 = arith.constant 0 : index
      %72 = vector.load %arg8[%c0_40, %c0_41] : memref<32x32xbf16, #tpu.memory_space<vmem>>, vector<32x32xbf16>
      %cst_42 = arith.constant dense<0.000000e+00> : vector<8x32xf32>
      %73 = tpu.matmul %71, %72, %cst_42 {dimension_numbers = #tpu.dot_dimension_numbers<[1], [0], [0], [1], [0, 0, 1, 1], [], []>} : vector<8x32xbf16>, vector<32x32xbf16>, vector<8x32xf32> -> vector<8x32xf32>
      %c0_43 = arith.constant 0 : index
      %c0_44 = arith.constant 0 : index
      %c0_45 = arith.constant 0 : index
      %74 = vector.load %arg9[%c0_43, %c0_44, %c0_45] : memref<1x8x32xf32, #tpu.memory_space<vmem>>, vector<1x8x32xf32>
      %75 = vector.shape_cast %74 : vector<1x8x32xf32> to vector<8x32xf32>
      %76 = vector.shape_cast %73 : vector<8x32xf32> to vector<1x8x32xf32>
      tpu.vector_store %arg9[%c0_43, %c0_44, %c0_45], %76 {strides = array<i32>} : memref<1x8x32xf32, #tpu.memory_space<vmem>>, vector<1x8x32xf32>,
    } else {
    }
    return
  }
  func.func @transform_0(%arg0: i32, %arg1: i32, %arg2: i32) -> (i32, i32, i32) {
    %c0_i32 = arith.constant 0 : i32
    %c0_i32_0 = arith.constant 0 : i32
    return %arg0, %arg1, %c0_i32 : i32, i32, i32
  }
  func.func @transform_1(%arg0: i32, %arg1: i32, %arg2: i32) -> (i32, i32, i32) {
    %c0_i32 = arith.constant 0 : i32
    %c0_i32_0 = arith.constant 0 : i32
    return %arg0, %arg2, %c0_i32 : i32, i32, i32
  }
  func.func @transform_2(%arg0: i32, %arg1: i32, %arg2: i32) -> (i32, i32) {
    %c0_i32 = arith.constant 0 : i32
    %c0_i32_0 = arith.constant 0 : i32
    %c0_i32_1 = arith.constant 0 : i32
    return %c0_i32, %c0_i32_0 : i32, i32
  }
  func.func @transform_3(%arg0: i32, %arg1: i32, %arg2: i32) -> (i32, i32) {
    %c0_i32 = arith.constant 0 : i32
    %c0_i32_0 = arith.constant 0 : i32
    %c0_i32_1 = arith.constant 0 : i32
    return %c0_i32, %c0_i32_0 : i32, i32
  }
  func.func @transform_4(%arg0: i32, %arg1: i32, %arg2: i32) -> (i32, i32) {
    %c0_i32 = arith.constant 0 : i32
    %c0_i32_0 = arith.constant 0 : i32
    %c0_i32_1 = arith.constant 0 : i32
    return %c0_i32, %c0_i32_0 : i32, i32
  }
  func.func @transform_5(%arg0: i32, %arg1: i32, %arg2: i32) -> (i32, i32) {
    %c0_i32 = arith.constant 0 : i32
    %c0_i32_0 = arith.constant 0 : i32
    %c0_i32_1 = arith.constant 0 : i32
    return %c0_i32, %c0_i32_0 : i32, i32
  }
  func.func @transform_6(%arg0: i32, %arg1: i32, %arg2: i32) -> (i32, i32, i32) {
    %c0_i32 = arith.constant 0 : i32
    %c0_i32_0 = arith.constant 0 : i32
    return %arg0, %arg1, %c0_i32 : i32, i32, i32
  }
}

</mosaic_0001>

<llo_original>
// kernel: tpu_custom_call.1
$region0: #{tpu_custom_call.1}
  #allocation0 [shape = 'u32[]', space=smem, size = 0x4, offset = 0x4, fixed_abs, tag = 'smem constant byte address 0x4 - core index']
  #allocation1 [shape = 'u32[72,128]{1,0:T(1,128)}', space=vmem, size = 0x9000, scoped, tag = 'internal scratch']
  #allocation2 [shape = 'bf16[4,8,8]{2,1,0:T(8,128)(2,1)}', space=vmem, size = 0x2000, scoped, tag = 'scratch operand']
  #allocation3 [shape = 'f32[4,8,1]{2,1,0:T(8,128)}', space=vmem, size = 0x4000, scoped, tag = 'scratch operand']
  #allocation4 [shape = 'f32[4,8,1]{2,1,0:T(8,128)}', space=vmem, size = 0x4000, scoped, tag = 'scratch operand']
  #allocation5 [shape = 'f32[4,8,8]{2,1,0:T(8,128)}', space=vmem, size = 0x4000, scoped, tag = 'scratch operand']
  %s0 = inlined_call_operand.hbm [shape: bf16[2,16,32], index: 0, kind: input, shape index: {}]
  %s1 = inlined_call_operand.hbm [shape: bf16[2,16,32], index: 1, kind: input, shape index: {}]
  %s2 = inlined_call_operand.hbm [shape: bf16[32,32], index: 2, kind: input, shape index: {}]
  %s3 = inlined_call_operand.hbm [shape: bf16[32,32], index: 3, kind: input, shape index: {}]
  %s4 = inlined_call_operand.hbm [shape: bf16[32,32], index: 4, kind: input, shape index: {}]
  %s5 = inlined_call_operand.hbm [shape: bf16[32,32], index: 5, kind: input, shape index: {}]
  %s6 = inlined_call_operand.hbm [shape: f32[2,16,32], index: 6, kind: output, shape index: {}]
  %s7 = sld [smem:[#allocation0]]
  $region89: #{tpu_custom_call.1} parent=0
    _
  %s9 = ssub.s32 1, %s7
  %s10 = scalar_select 0, %s9, %s7
  $region1: #{tpu_custom_call.1} parent=0
    #allocation6 [shape = 'u8[4096]{0}', space=vmem, size = 0x1000, scoped, tag = 'input window, operand 0']
    #allocation7 [shape = 's32[2]{0}', space=sflag, size = 0x8, scoped, tag = 'scoped memory for tpu_custom_call.1']
    #allocation8 [shape = 's32[2]{0}', space=sflag, size = 0x8, scoped, tag = 'scoped memory for tpu_custom_call.1']
    #allocation9 [shape = 'u8[4096]{0}', space=vmem, size = 0x1000, scoped, tag = 'input window, operand 1']
    #allocation10 [shape = 's32[2]{0}', space=sflag, size = 0x8, scoped, tag = 'scoped memory for tpu_custom_call.1']
    #allocation11 [shape = 'u8[8192]{0}', space=vmem, size = 0x2000, scoped, tag = 'input window, operand 2, single buffered']
    #allocation12 [shape = 'u8[8192]{0}', space=vmem, size = 0x2000, scoped, tag = 'input window, operand 3, single buffered']
    #allocation13 [shape = 's32[1]{0}', space=sflag, size = 0x4, scoped, tag = 'scoped memory for tpu_custom_call.1']
    #allocation14 [shape = 'u8[8192]{0}', space=vmem, size = 0x2000, scoped, tag = 'input window, operand 4, single buffered']
    #allocation15 [shape = 'u8[8192]{0}', space=vmem, size = 0x2000, scoped, tag = 'input window, operand 5, single buffered']
    #allocation16 [shape = 's32[1]{0}', space=sflag, size = 0x4, scoped, tag = 'scoped memory for tpu_custom_call.1']
    #allocation17 [shape = 'u8[8192]{0}', space=vmem, size = 0x2000, scoped, tag = 'output window, operand 0']
    %11 = vsyncpa [#allocation7], 0
    %s12 = scalar_lea.sflag [#allocation7], 1
    %13 = vsyncpa %s12, 0
    %14 = vsyncpa [#allocation10], 0
    %s15 = scalar_lea.sflag [#allocation10], 1
    %16 = vsyncpa %s15, 0
    %17 = vsyncpa [#allocation13], 0
    %18 = vsyncpa [#allocation16], 0
    %19 = vsyncpa [#allocation8], 0
    %s20 = scalar_lea.sflag [#allocation8], 1
    %21 = vsyncpa %s20, 0
    loop: start=0, step=1, limit=10
    $region2: #{tpu_custom_call.1} parent=1 // loop_pre_header
      _
    $region3: #{tpu_custom_call.1} parent=1 // loop_header
      %s23 = sphi 0, %s27
      %p24 = scmp.ge.s32.totalorder %s23, 10
      %s30 = sphi 0, %s49
      %s31 = sphi 0, %s45
      %s32 = sphi 0, %s41
      %s33 = sphi 0, %s30
      %s34 = sphi 0, %s31
      %s35 = sphi 0, %s32
      %s36 = sphi 0, %s33
      %s37 = sphi 0, %s34
      %s38 = sphi 0, %s35
      %s54 = sphi 0, %s56
      %s57 = sphi 0, %s54
      %s58 = sphi 0, %s57
      %s74 = sphi 0, %s58
      %s82 = sphi 0, %s84
      %s85 = sphi 0, %s82
      %s86 = sphi 0, %s85
      %s102 = sphi 0, %s86
      %s106 = sphi 0, %s106
      %s108 = sphi 0, %s106
      %s109 = sphi 0, %s108
      %s123 = sphi 0, %s109
      %s127 = sphi 0, %s127
      %s129 = sphi 0, %s127
      %s130 = sphi 0, %s129
      %s144 = sphi 0, %s130
      %s148 = sphi 0, %s148
      %s150 = sphi 0, %s148
      %s151 = sphi 0, %s150
      %s165 = sphi 0, %s151
      %s169 = sphi 0, %s169
      %s171 = sphi 0, %s169
      %s172 = sphi 0, %s171
      %s186 = sphi 0, %s172
      %s194 = sphi 0, %s196
      %s197 = sphi 0, %s194
      %s198 = sphi 0, %s197
      %s214 = sphi 0, %s198
    $region4: #{tpu_custom_call.1} parent=1 // loop_header_branch
      %26 = sbr.rel (%p24) target = $region8
    $region5: #{tpu_custom_call.1} parent=1 // loop_body
      %s28 = ssub.s32 %s23, 1
      %s29 = ssub.s32 %s23, 2
      %s39 = sadd.s32 1, %s32
      %p40 = scmp.ge.s32.totalorder %s39, 2
      %s41 = scalar_select %p40, 0, %s39
      %s42 = sadd.s32 1, %s31
      %s43 = scalar_select %p40, %s42, %s31
      %p44 = scmp.ge.s32.totalorder %s43, 2
      %s45 = scalar_select %p44, 0, %s43
      %s46 = sadd.s32 1, %s30
      %s47 = scalar_select %p44, %s46, %s30
      %p48 = scmp.ge.s32.totalorder %s47, 2
      %s49 = scalar_select %p48, 0, %s47
      %s50 = ssub.s32 %s30, %s49
      %s51 = ssub.s32 %s31, %s45
      %s52 = sor.u32 %s50, %s51
      %p53 = scmp.eq.s32.totalorder %s52, 0
      %s55 = sadd.s32 %s54, 1
      %s56 = scalar_select %p53, %s54, %s55
      %p59 = pneg %p53
      %p60 = scmp.eq.s32.totalorder %s23, 7
      %p61 = por %p59, %p60
      %p62 = scmp.ne.s32.totalorder %s54, %s57
      %p63 = scmp.eq.s32.totalorder %s23, 0
      %p64 = por %p62, %p63
      %p65 = scmp.ne.s32.totalorder %s54, %s57
      %p66 = scmp.eq.s32.totalorder %s28, 7
      %p67 = por %p65, %p66
      %p68 = scmp.ne.s32.totalorder %s57, %s58
      %p69 = scmp.eq.s32.totalorder %s28, 0
      %p70 = por %p68, %p69
      %p71 = scmp.ne.s32.totalorder %s57, %s58
      %p72 = scmp.eq.s32.totalorder %s29, 7
      %p73 = por %p71, %p72
      %p75 = scmp.ne.s32.totalorder %s58, %s74
      %p76 = scmp.eq.s32.totalorder %s29, 0
      %p77 = por %p75, %p76
      %s78 = ssub.s32 %s30, %s49
      %s79 = ssub.s32 %s32, %s41
      %s80 = sor.u32 %s78, %s79
      %p81 = scmp.eq.s32.totalorder %s80, 0
      %s83 = sadd.s32 %s82, 1
      %s84 = scalar_select %p81, %s82, %s83
      %p87 = pneg %p81
      %p88 = scmp.eq.s32.totalorder %s23, 7
      %p89 = por %p87, %p88
      %p90 = scmp.ne.s32.totalorder %s82, %s85
      %p91 = scmp.eq.s32.totalorder %s23, 0
      %p92 = por %p90, %p91
      %p93 = scmp.ne.s32.totalorder %s82, %s85
      %p94 = scmp.eq.s32.totalorder %s28, 7
      %p95 = por %p93, %p94
      %p96 = scmp.ne.s32.totalorder %s85, %s86
      %p97 = scmp.eq.s32.totalorder %s28, 0
      %p98 = por %p96, %p97
      %p99 = scmp.ne.s32.totalorder %s85, %s86
      %p100 = scmp.eq.s32.totalorder %s29, 7
      %p101 = por %p99, %p100
      %p103 = scmp.ne.s32.totalorder %s86, %s102
      %p104 = scmp.eq.s32.totalorder %s29, 0
      %p105 = por %p103, %p104
      %s107 = sadd.s32 %s106, 1
      %p110 = scmp.eq.s32.totalorder %s23, 7
      %p111 = scmp.ne.s32.totalorder %s106, %s108
      %p112 = scmp.eq.s32.totalorder %s23, 0
      %p113 = por %p111, %p112
      %p114 = scmp.ne.s32.totalorder %s106, %s108
      %p115 = scmp.eq.s32.totalorder %s28, 7
      %p116 = por %p114, %p115
      %p117 = scmp.ne.s32.totalorder %s108, %s109
      %p118 = scmp.eq.s32.totalorder %s28, 0
      %p119 = por %p117, %p118
      %p120 = scmp.ne.s32.totalorder %s108, %s109
      %p121 = scmp.eq.s32.totalorder %s29, 7
      %p122 = por %p120, %p121
      %p124 = scmp.ne.s32.totalorder %s109, %s123
      %p125 = scmp.eq.s32.totalorder %s29, 0
      %p126 = por %p124, %p125
      %s128 = sadd.s32 %s127, 1
      %p131 = scmp.eq.s32.totalorder %s23, 7
      %p132 = scmp.ne.s32.totalorder %s127, %s129
      %p133 = scmp.eq.s32.totalorder %s23, 0
      %p134 = por %p132, %p133
      %p135 = scmp.ne.s32.totalorder %s127, %s129
      %p136 = scmp.eq.s32.totalorder %s28, 7
      %p137 = por %p135, %p136
      %p138 = scmp.ne.s32.totalorder %s129, %s130
      %p139 = scmp.eq.s32.totalorder %s28, 0
      %p140 = por %p138, %p139
      %p141 = scmp.ne.s32.totalorder %s129, %s130
      %p142 = scmp.eq.s32.totalorder %s29, 7
      %p143 = por %p141, %p142
      %p145 = scmp.ne.s32.totalorder %s130, %s144
      %p146 = scmp.eq.s32.totalorder %s29, 0
      %p147 = por %p145, %p146
      %s149 = sadd.s32 %s148, 1
      %p152 = scmp.eq.s32.totalorder %s23, 7
      %p153 = scmp.ne.s32.totalorder %s148, %s150
      %p154 = scmp.eq.s32.totalorder %s23, 0
      %p155 = por %p153, %p154
      %p156 = scmp.ne.s32.totalorder %s148, %s150
      %p157 = scmp.eq.s32.totalorder %s28, 7
      %p158 = por %p156, %p157
      %p159 = scmp.ne.s32.totalorder %s150, %s151
      %p160 = scmp.eq.s32.totalorder %s28, 0
      %p161 = por %p159, %p160
      %p162 = scmp.ne.s32.totalorder %s150, %s151
      %p163 = scmp.eq.s32.totalorder %s29, 7
      %p164 = por %p162, %p163
      %p166 = scmp.ne.s32.totalorder %s151, %s165
      %p167 = scmp.eq.s32.totalorder %s29, 0
      %p168 = por %p166, %p167
      %s170 = sadd.s32 %s169, 1
      %p173 = scmp.eq.s32.totalorder %s23, 7
      %p174 = scmp.ne.s32.totalorder %s169, %s171
      %p175 = scmp.eq.s32.totalorder %s23, 0
      %p176 = por %p174, %p175
      %p177 = scmp.ne.s32.totalorder %s169, %s171
      %p178 = scmp.eq.s32.totalorder %s28, 7
      %p179 = por %p177, %p178
      %p180 = scmp.ne.s32.totalorder %s171, %s172
      %p181 = scmp.eq.s32.totalorder %s28, 0
      %p182 = por %p180, %p181
      %p183 = scmp.ne.s32.totalorder %s171, %s172
      %p184 = scmp.eq.s32.totalorder %s29, 7
      %p185 = por %p183, %p184
      %p187 = scmp.ne.s32.totalorder %s172, %s186
      %p188 = scmp.eq.s32.totalorder %s29, 0
      %p189 = por %p187, %p188
      %s190 = ssub.s32 %s30, %s49
      %s191 = ssub.s32 %s31, %s45
      %s192 = sor.u32 %s190, %s191
      %p193 = scmp.eq.s32.totalorder %s192, 0
      %s195 = sadd.s32 %s194, 1
      %s196 = scalar_select %p193, %s194, %s195
      %p199 = pneg %p193
      %p200 = scmp.eq.s32.totalorder %s23, 7
      %p201 = por %p199, %p200
      %p202 = scmp.ne.s32.totalorder %s194, %s197
      %p203 = scmp.eq.s32.totalorder %s23, 0
      %p204 = por %p202, %p203
      %p205 = scmp.ne.s32.totalorder %s194, %s197
      %p206 = scmp.eq.s32.totalorder %s28, 7
      %p207 = por %p205, %p206
      %p208 = scmp.ne.s32.totalorder %s197, %s198
      %p209 = scmp.eq.s32.totalorder %s28, 0
      %p210 = por %p208, %p209
      %p211 = scmp.ne.s32.totalorder %s197, %s198
      %p212 = scmp.eq.s32.totalorder %s29, 7
      %p213 = por %p211, %p212
      %p215 = scmp.ne.s32.totalorder %s198, %s214
      %p216 = scmp.eq.s32.totalorder %s29, 0
      %p217 = por %p215, %p216
      %p218 = scmp.le.s32.totalorder 1, %s23
      %p219 = scmp.lt.s32.totalorder %s23, 9
      %p220 = pnand %p218, %p219
      %p221 = pneg %p220
      // Predicated region
      $region9: #{tpu_custom_call.1} parent=5 // pred_check
        _
      $region10: #{tpu_custom_call.1} parent=5 // pred_check_branch
        %223 = sbr.rel (%p220) target = $region12
      $region11: #{tpu_custom_call.1} parent=5 // pred_region
        %s224 = ssub.s32 %s23, 1
        // Predicated region
        $region13: #{tpu_custom_call.1} parent=11 // pred_check
          %p225 = pneg %p119
        $region14: #{tpu_custom_call.1} parent=11 // pred_check_branch
          %227 = sbr.rel (%p225) target = $region16
        $region15: #{tpu_custom_call.1} parent=11 // pred_region
          %229 = vsyncadd [#allocation10], 0
          %s230 = sshll.u32 %s2, 4
          %s231 = int_to_ptr.hbm [resolvable:$true] %s230
          %s232 = sshll.u32 [#allocation11], 4
          %s233 = int_to_ptr.vmem [resolvable:$true] %s232
          %238 = dma.hbm_to_vmem [thread:$0]  %s231, 256, %s233, [#allocation10], 64, 64, 4
        $region16: #{tpu_custom_call.1} parent=11 // pred_fallthru
          _
        // Predicated region
        $region17: #{tpu_custom_call.1} parent=11 // pred_check
          %p239 = pneg %p140
        $region18: #{tpu_custom_call.1} parent=11 // pred_check_branch
          %241 = sbr.rel (%p239) target = $region20
        $region19: #{tpu_custom_call.1} parent=11 // pred_region
          %243 = vsyncadd [#allocation13], 0
          %s244 = sshll.u32 %s3, 4
          %s245 = int_to_ptr.hbm [resolvable:$true] %s244
          %s246 = sshll.u32 [#allocation12], 4
          %s247 = int_to_ptr.vmem [resolvable:$true] %s246
          %252 = dma.hbm_to_vmem [thread:$0]  %s245, 256, %s247, [#allocation13], 64, 64, 4
        $region20: #{tpu_custom_call.1} parent=11 // pred_fallthru
          _
        // Predicated region
        $region21: #{tpu_custom_call.1} parent=11 // pred_check
          %p253 = pneg %p161
        $region22: #{tpu_custom_call.1} parent=11 // pred_check_branch
          %255 = sbr.rel (%p253) target = $region24
        $region23: #{tpu_custom_call.1} parent=11 // pred_region
          %257 = vsyncadd [#allocation13], 0
          %s258 = sshll.u32 %s4, 4
          %s259 = int_to_ptr.hbm [resolvable:$true] %s258
          %s260 = sshll.u32 [#allocation14], 4
          %s261 = int_to_ptr.vmem [resolvable:$true] %s260
          %266 = dma.hbm_to_vmem [thread:$0]  %s259, 256, %s261, [#allocation13], 64, 64, 4
        $region24: #{tpu_custom_call.1} parent=11 // pred_fallthru
          _
        // Predicated region
        $region25: #{tpu_custom_call.1} parent=11 // pred_check
          %p267 = pneg %p182
        $region26: #{tpu_custom_call.1} parent=11 // pred_check_branch
          %269 = sbr.rel (%p267) target = $region28
        $region27: #{tpu_custom_call.1} parent=11 // pred_region
          %271 = vsyncadd [#allocation16], 0
          %s272 = sshll.u32 %s5, 4
          %s273 = int_to_ptr.hbm [resolvable:$true] %s272
          %s274 = sshll.u32 [#allocation15], 4
          %s275 = int_to_ptr.vmem [resolvable:$true] %s274
          %280 = dma.hbm_to_vmem [thread:$0]  %s273, 256, %s275, [#allocation16], 64, 64, 4
        $region28: #{tpu_custom_call.1} parent=11 // pred_fallthru
          _
      $region12: #{tpu_custom_call.1} parent=5 // pred_fallthru
        _
      %p281 = scmp.lt.s32.totalorder %s23, 8
      // Predicated region
      $region29: #{tpu_custom_call.1} parent=5 // pred_check
        %p282 = pneg %p281
      $region30: #{tpu_custom_call.1} parent=5 // pred_check_branch
        %284 = sbr.rel (%p282) target = $region32
      $region31: #{tpu_custom_call.1} parent=5 // pred_region
        // Predicated region
        $region33: #{tpu_custom_call.1} parent=31 // pred_check
          %p285 = pneg %p64
        $region34: #{tpu_custom_call.1} parent=31 // pred_check_branch
          %287 = sbr.rel (%p285) target = $region36
        $region35: #{tpu_custom_call.1} parent=31 // pred_region
          %s288 = sand.u32 %s54, 1
          %s289 = scalar_lea.sflag [#allocation7], %s288
          %s290 = sand.u32 %s54, 1
          %s291 = smul.addr %s290, 4
          %s292 = scalar_lea.vmem [#allocation6], %s291
          %294 = vsyncadd %s289, 0
          %s295 = smul.addr %s30, 2
          %s296 = sadd.s32 %s31, %s295
          %s297 = smul.addr %s296, 4
          %s298 = scalar_lea.hbm %s0, %s297
          %s300 = sshll.u32 %s298, 4
          %s301 = int_to_ptr.hbm [resolvable:$true] %s300
          %s302 = sshll.u32 %s292, 4
          %s303 = int_to_ptr.vmem [resolvable:$true] %s302
          %305 = dma.hbm_to_vmem [thread:$0]  %s301, 64, %s303, %s289
        $region36: #{tpu_custom_call.1} parent=31 // pred_fallthru
          _
        // Predicated region
        $region37: #{tpu_custom_call.1} parent=31 // pred_check
          %p306 = pneg %p92
        $region38: #{tpu_custom_call.1} parent=31 // pred_check_branch
          %308 = sbr.rel (%p306) target = $region40
        $region39: #{tpu_custom_call.1} parent=31 // pred_region
          %s309 = sand.u32 %s23, 1
          %s310 = scalar_lea.sflag [#allocation10], %s309
          %s311 = sand.u32 %s82, 1
          %s312 = smul.addr %s311, 4
          %s313 = scalar_lea.vmem [#allocation9], %s312
          %315 = vsyncadd %s310, 0
          %s316 = smul.addr %s30, 2
          %s317 = sadd.s32 %s32, %s316
          %s318 = smul.addr %s317, 4
          %s319 = scalar_lea.hbm %s1, %s318
          %s321 = sshll.u32 %s319, 4
          %s322 = int_to_ptr.hbm [resolvable:$true] %s321
          %s323 = sshll.u32 %s313, 4
          %s324 = int_to_ptr.vmem [resolvable:$true] %s323
          %326 = dma.hbm_to_vmem [thread:$0]  %s322, 64, %s324, %s310
        $region40: #{tpu_custom_call.1} parent=31 // pred_fallthru
          _
      $region32: #{tpu_custom_call.1} parent=5 // pred_fallthru
        _
      %p327 = scmp.le.s32.totalorder 1, %s23
      %p328 = scmp.lt.s32.totalorder %s23, 9
      %p329 = pnand %p327, %p328
      %p330 = pneg %p329
      // Predicated region
      $region41: #{tpu_custom_call.1} parent=5 // pred_check
        _
      $region42: #{tpu_custom_call.1} parent=5 // pred_check_branch
        %332 = sbr.rel (%p329) target = $region44
      $region43: #{tpu_custom_call.1} parent=5 // pred_region
        %s333 = ssub.s32 %s23, 1
        %s334 = sand.u32 %s57, 1
        %s335 = scalar_lea.sflag [#allocation7], %s334
        %s336 = sand.u32 %s57, 1
        %s337 = smul.addr %s336, 4
        %s338 = scalar_lea.vmem [#allocation6], %s337
        // Predicated region
        $region45: #{tpu_custom_call.1} parent=43 // pred_check
          %p339 = pneg %p70
        $region46: #{tpu_custom_call.1} parent=43 // pred_check_branch
          %341 = sbr.rel (%p339) target = $region48
        $region47: #{tpu_custom_call.1} parent=43 // pred_region
          %343 = dma.done %s335, 64
        $region48: #{tpu_custom_call.1} parent=43 // pred_fallthru
          _
        %s344 = sand.u32 %s28, 1
        %s345 = scalar_lea.sflag [#allocation10], %s344
        %s346 = sand.u32 %s85, 1
        %s347 = smul.addr %s346, 4
        %s348 = scalar_lea.vmem [#allocation9], %s347
        // Predicated region
        $region49: #{tpu_custom_call.1} parent=43 // pred_check
          %p349 = pneg %p98
        $region50: #{tpu_custom_call.1} parent=43 // pred_check_branch
          %351 = sbr.rel (%p349) target = $region52
        $region51: #{tpu_custom_call.1} parent=43 // pred_region
          %353 = dma.done %s345, 64
        $region52: #{tpu_custom_call.1} parent=43 // pred_fallthru
          _
        // Predicated region
        $region53: #{tpu_custom_call.1} parent=43 // pred_check
          %p354 = pneg %p119
        $region54: #{tpu_custom_call.1} parent=43 // pred_check_branch
          %356 = sbr.rel (%p354) target = $region56
        $region55: #{tpu_custom_call.1} parent=43 // pred_region
          %358 = dma.done [#allocation10], 256
        $region56: #{tpu_custom_call.1} parent=43 // pred_fallthru
          _
        // Predicated region
        $region57: #{tpu_custom_call.1} parent=43 // pred_check
          %p359 = pneg %p140
        $region58: #{tpu_custom_call.1} parent=43 // pred_check_branch
          %361 = sbr.rel (%p359) target = $region60
        $region59: #{tpu_custom_call.1} parent=43 // pred_region
          %363 = dma.done [#allocation13], 256
        $region60: #{tpu_custom_call.1} parent=43 // pred_fallthru
          _
        // Predicated region
        $region61: #{tpu_custom_call.1} parent=43 // pred_check
          %p364 = pneg %p161
        $region62: #{tpu_custom_call.1} parent=43 // pred_check_branch
          %366 = sbr.rel (%p364) target = $region64
        $region63: #{tpu_custom_call.1} parent=43 // pred_region
          %368 = dma.done [#allocation13], 256
        $region64: #{tpu_custom_call.1} parent=43 // pred_fallthru
          _
        // Predicated region
        $region65: #{tpu_custom_call.1} parent=43 // pred_check
          %p369 = pneg %p182
        $region66: #{tpu_custom_call.1} parent=43 // pred_check_branch
          %371 = sbr.rel (%p369) target = $region68
        $region67: #{tpu_custom_call.1} parent=43 // pred_region
          %373 = dma.done [#allocation16], 256
        $region68: #{tpu_custom_call.1} parent=43 // pred_fallthru
          _
        %s374 = sand.u32 %s57, 1
        %s375 = scalar_lea.sflag [#allocation7], %s374
        %s376 = sand.u32 %s57, 1
        %s377 = smul.addr %s376, 4
        %s378 = scalar_lea.vmem [#allocation6], %s377
        %p379 = pneg %p70
        %p380 = pneg %p67
        %s381 = sand.u32 %s28, 1
        %s382 = scalar_lea.sflag [#allocation10], %s381
        %s383 = sand.u32 %s85, 1
        %s384 = smul.addr %s383, 4
        %s385 = scalar_lea.vmem [#allocation9], %s384
        %p386 = pneg %p98
        %p387 = pneg %p95
        %p388 = pneg %p119
        %p389 = pneg %p116
        %p390 = pneg %p140
        %p391 = pneg %p137
        %p392 = pneg %p161
        %p393 = pneg %p158
        %p394 = pneg %p182
        %p395 = pneg %p179
        %p396 = pneg %p210
        %p397 = pneg %p207
        %s398 = sand.u32 %s197, 1
        %s399 = scalar_lea.sflag [#allocation8], %s398
        %s400 = sand.u32 %s197, 1
        %s401 = smul.addr %s400, 8
        %s402 = scalar_lea.vmem [#allocation17], %s401
        %p404 = scmp.eq.s32.totalorder %s35, 0
        // Predicated region
        $region69: #{tpu_custom_call.1} parent=43 // pred_check
          %p405 = pneg %p404
        $region70: #{tpu_custom_call.1} parent=43 // pred_check_branch
          %407 = sbr.rel (%p405) target = $region72
        $region71: #{tpu_custom_call.1} parent=43 // pred_region
          %v408 = vld [vmem:[%s338] sm:$0xf]
          %v409 = vld [vmem:[#allocation11] sm:$0xf]
          %v410 = vld [vmem:[#allocation11 + $0x4] sm:$0xf]
          %v411 = vld [vmem:[#allocation11 + $0x8] sm:$0xf]
          %v412 = vld [vmem:[#allocation11 + $0xc] sm:$0xf]
          %v417 = vunpack.c.l.b16 %v409
          %v418 = vunpack.c.l.b16 %v410
          %v419 = vunpack.c.l.b16 %v411
          %v420 = vunpack.c.l.b16 %v412
          %v421 = vpack.c.b16 %v418, %v417
          %v422 = vpack.c.b16 %v420, %v419
          %vm425 = vcmask 261120
          %v427 = vsel %vm425, %v408, 0
          %429 = vmatpush.bf16.msra.mxu0 0
          %430 = vmatpush.bf16.msra.mxu0 0
          %431 = vmatpush.bf16.msra.mxu0 0
          %432 = vmatpush.bf16.msra.mxu0 0
          %433 = vmatpush.bf16.msra.mxu0 0
          %434 = vmatpush.bf16.msra.mxu0 0
          %435 = vmatpush.bf16.msra.mxu0 %v422
          %436 = vmatpush.bf16.msra.mxu0 %v421
          %437 = vmatmul.bf16.gmra.mxu0 %v427
          %v438 = vpop.f32.mrf.mxu0
          %v439 = vadd.f32 0.0, %v438
          %v440 = vpop.f32.mrf.mxu0
          %441 = vdwg.mxu0
          %v442 = vmul.f32 %v439, 0.35355338
          %444 = vrot.lane.b32.xlu0 %v442, 120
          %v445 = vpop.permute.xlu0 %444
          %447 = vrot.lane.b32.xlu0 %v442, 112
          %v448 = vpop.permute.xlu0 %447
          %450 = vrot.lane.b32.xlu0 %v442, 104
          %v451 = vpop.permute.xlu0 %450
          %v453 = vpack.c.bf16 %v442, %v442
          %v454 = vpack.c.bf16 %v445, %v445
          %v455 = vpack.c.bf16 %v448, %v448
          %v456 = vpack.c.bf16 %v451, %v451
          %vm457 = vcmask 60416
          %458 = vst.msk [vmem:[#allocation2] sm:$0xf] %vm457, %v453
          %459 = vst.msk [vmem:[#allocation2 + $0x4] sm:$0xf] %vm457, %v454
          %460 = vst.msk [vmem:[#allocation2 + $0x8] sm:$0xf] %vm457, %v455
          %461 = vst.msk [vmem:[#allocation2 + $0xc] sm:$0xf] %vm457, %v456
          %vm462 = vcmask 7168
          %463 = vst.msk [vmem:[#allocation3] sm:$0xff] %vm462, -inf
          %464 = vst.msk [vmem:[#allocation3 + $0x8] sm:$0xff] %vm462, -inf
          %465 = vst.msk [vmem:[#allocation3 + $0x10] sm:$0xff] %vm462, -inf
          %466 = vst.msk [vmem:[#allocation3 + $0x18] sm:$0xff] %vm462, -inf
          %467 = vst.msk [vmem:[#allocation4] sm:$0xff] %vm462, 0.0
          %468 = vst.msk [vmem:[#allocation4 + $0x8] sm:$0xff] %vm462, 0.0
          %469 = vst.msk [vmem:[#allocation4 + $0x10] sm:$0xff] %vm462, 0.0
          %470 = vst.msk [vmem:[#allocation4 + $0x18] sm:$0xff] %vm462, 0.0
          %vm471 = vcmask 64512
          %472 = vst.msk [vmem:[#allocation5] sm:$0xff] %vm471, 0.0
          %473 = vst.msk [vmem:[#allocation5 + $0x8] sm:$0xff] %vm471, 0.0
          %474 = vst.msk [vmem:[#allocation5 + $0x10] sm:$0xff] %vm471, 0.0
          %475 = vst.msk [vmem:[#allocation5 + $0x18] sm:$0xff] %vm471, 0.0
        $region72: #{tpu_custom_call.1} parent=43 // pred_fallthru
          _
        %v476 = vld [vmem:[%s348] sm:$0xf]
        %v477 = vld [vmem:[#allocation12] sm:$0xf]
        %v478 = vld [vmem:[#allocation12 + $0x4] sm:$0xf]
        %v479 = vld [vmem:[#allocation12 + $0x8] sm:$0xf]
        %v480 = vld [vmem:[#allocation12 + $0xc] sm:$0xf]
        %v485 = vunpack.c.l.b16 %v477
        %v486 = vunpack.c.l.b16 %v478
        %v487 = vunpack.c.l.b16 %v479
        %v488 = vunpack.c.l.b16 %v480
        %v489 = vpack.c.b16 %v486, %v485
        %v490 = vpack.c.b16 %v488, %v487
        %vm493 = vcmask 261120
        %v495 = vsel %vm493, %v476, 0
        %497 = vmatpush.bf16.msra.mxu0 0
        %498 = vmatpush.bf16.msra.mxu0 0
        %499 = vmatpush.bf16.msra.mxu0 0
        %500 = vmatpush.bf16.msra.mxu0 0
        %501 = vmatpush.bf16.msra.mxu0 0
        %502 = vmatpush.bf16.msra.mxu0 0
        %503 = vmatpush.bf16.msra.mxu0 %v490
        %504 = vmatpush.bf16.msra.mxu0 %v489
        %505 = vmatmul.bf16.gmra.mxu0 %v495
        %v506 = vpop.f32.mrf.mxu0
        %v507 = vadd.f32 0.0, %v506
        %v508 = vpop.f32.mrf.mxu0
        %509 = vdwg.mxu0
        %v510 = vld [vmem:[#allocation14] sm:$0xf]
        %v511 = vld [vmem:[#allocation14 + $0x4] sm:$0xf]
        %v512 = vld [vmem:[#allocation14 + $0x8] sm:$0xf]
        %v513 = vld [vmem:[#allocation14 + $0xc] sm:$0xf]
        %v518 = vunpack.c.l.b16 %v510
        %v519 = vunpack.c.l.b16 %v511
        %v520 = vunpack.c.l.b16 %v512
        %v521 = vunpack.c.l.b16 %v513
        %v522 = vpack.c.b16 %v519, %v518
        %v523 = vpack.c.b16 %v521, %v520
        %526 = vmatpush.bf16.msra.mxu0 0
        %527 = vmatpush.bf16.msra.mxu0 0
        %528 = vmatpush.bf16.msra.mxu0 0
        %529 = vmatpush.bf16.msra.mxu0 0
        %530 = vmatpush.bf16.msra.mxu0 0
        %531 = vmatpush.bf16.msra.mxu0 0
        %532 = vmatpush.bf16.msra.mxu0 %v523
        %533 = vmatpush.bf16.msra.mxu0 %v522
        %534 = vmatmul.bf16.gmra.mxu0 %v495
        %v535 = vpop.f32.mrf.mxu0
        %v536 = vadd.f32 0.0, %v535
        %v537 = vpop.f32.mrf.mxu0
        %538 = vdwg.mxu0
        %540 = vrot.lane.b32.xlu0 %v507, 120
        %v541 = vpop.permute.xlu0 %540
        %543 = vrot.lane.b32.xlu0 %v507, 112
        %v544 = vpop.permute.xlu0 %543
        %546 = vrot.lane.b32.xlu0 %v507, 104
        %v547 = vpop.permute.xlu0 %546
        %v549 = vpack.c.bf16 %v507, %v507
        %v550 = vpack.c.bf16 %v541, %v541
        %v551 = vpack.c.bf16 %v544, %v544
        %v552 = vpack.c.bf16 %v547, %v547
        %554 = vrot.lane.b32.xlu0 %v536, 120
        %v555 = vpop.permute.xlu0 %554
        %557 = vrot.lane.b32.xlu0 %v536, 112
        %v558 = vpop.permute.xlu0 %557
        %560 = vrot.lane.b32.xlu0 %v536, 104
        %v561 = vpop.permute.xlu0 %560
        %v563 = vpack.c.bf16 %v536, %v536
        %v564 = vpack.c.bf16 %v555, %v555
        %v565 = vpack.c.bf16 %v558, %v558
        %v566 = vpack.c.bf16 %v561, %v561
        %v567 = vld [vmem:[#allocation2] sm:$0xf]
        %v568 = vld [vmem:[#allocation2 + $0x4] sm:$0xf]
        %v569 = vld [vmem:[#allocation2 + $0x8] sm:$0xf]
        %v570 = vld [vmem:[#allocation2 + $0xc] sm:$0xf]
        %vm571 = vcmask 64512
        %v573 = vsel %vm571, %v567, 0
        %v576 = vsel %vm571, %v549, 0
        %578 = vmatpush.bf16.xpose.msra.mxu0 0
        %579 = vmatpush.bf16.xpose.msra.mxu0 0
        %580 = vmatpush.bf16.xpose.msra.mxu0 0
        %581 = vmatpush.bf16.xpose.msra.mxu0 0
        %582 = vmatpush.bf16.xpose.msra.mxu0 0
        %583 = vmatpush.bf16.xpose.msra.mxu0 0
        %584 = vmatpush.bf16.xpose.msra.mxu0 0
        %585 = vmatpush.bf16.xpose.msra.mxu0 %v576
        %586 = vmatmul.bf16.gmra.mxu0 %v573
        %v587 = vpop.f32.mrf.mxu0
        %v588 = vadd.f32 0.0, %v587
        %v589 = vpop.f32.mrf.mxu0
        %590 = vdwg.mxu0
        %v592 = vsel %vm571, %v568, 0
        %v595 = vsel %vm571, %v550, 0
        %597 = vmatpush.bf16.xpose.msra.mxu0 0
        %598 = vmatpush.bf16.xpose.msra.mxu0 0
        %599 = vmatpush.bf16.xpose.msra.mxu0 0
        %600 = vmatpush.bf16.xpose.msra.mxu0 0
        %601 = vmatpush.bf16.xpose.msra.mxu0 0
        %602 = vmatpush.bf16.xpose.msra.mxu0 0
        %603 = vmatpush.bf16.xpose.msra.mxu0 0
        %604 = vmatpush.bf16.xpose.msra.mxu0 %v595
        %605 = vmatmul.bf16.gmra.mxu0 %v592
        %v606 = vpop.f32.mrf.mxu0
        %v607 = vadd.f32 0.0, %v606
        %v608 = vpop.f32.mrf.mxu0
        %609 = vdwg.mxu0
        %v611 = vsel %vm571, %v569, 0
        %v614 = vsel %vm571, %v551, 0
        %616 = vmatpush.bf16.xpose.msra.mxu0 0
        %617 = vmatpush.bf16.xpose.msra.mxu0 0
        %618 = vmatpush.bf16.xpose.msra.mxu0 0
        %619 = vmatpush.bf16.xpose.msra.mxu0 0
        %620 = vmatpush.bf16.xpose.msra.mxu0 0
        %621 = vmatpush.bf16.xpose.msra.mxu0 0
        %622 = vmatpush.bf16.xpose.msra.mxu0 0
        %623 = vmatpush.bf16.xpose.msra.mxu0 %v614
        %624 = vmatmul.bf16.gmra.mxu0 %v611
        %v625 = vpop.f32.mrf.mxu0
        %v626 = vadd.f32 0.0, %v625
        %v627 = vpop.f32.mrf.mxu0
        %628 = vdwg.mxu0
        %v630 = vsel %vm571, %v570, 0
        %v633 = vsel %vm571, %v552, 0
        %635 = vmatpush.bf16.xpose.msra.mxu0 0
        %636 = vmatpush.bf16.xpose.msra.mxu0 0
        %637 = vmatpush.bf16.xpose.msra.mxu0 0
        %638 = vmatpush.bf16.xpose.msra.mxu0 0
        %639 = vmatpush.bf16.xpose.msra.mxu0 0
        %640 = vmatpush.bf16.xpose.msra.mxu0 0
        %641 = vmatpush.bf16.xpose.msra.mxu0 0
        %642 = vmatpush.bf16.xpose.msra.mxu0 %v633
        %643 = vmatmul.bf16.gmra.mxu0 %v630
        %v644 = vpop.f32.mrf.mxu0
        %v645 = vadd.f32 0.0, %v644
        %v646 = vpop.f32.mrf.mxu0
        %647 = vdwg.mxu0
        %v648 = vld [vmem:[#allocation3] sm:$0xff]
        %v649 = vld [vmem:[#allocation3 + $0x8] sm:$0xff]
        %v650 = vld [vmem:[#allocation3 + $0x10] sm:$0xff]
        %v651 = vld [vmem:[#allocation3 + $0x18] sm:$0xff]
        %v652 = vsel %vm571, %v588, -inf
        %653 = vmax.xlane.f32.xlu0 %v652
        %v654 = vpop.xlane.xlu0 %653
        %v655 = vsel %vm571, %v607, -inf
        %656 = vmax.xlane.f32.xlu0 %v655
        %v657 = vpop.xlane.xlu0 %656
        %v658 = vsel %vm571, %v626, -inf
        %659 = vmax.xlane.f32.xlu0 %v658
        %v660 = vpop.xlane.xlu0 %659
        %v661 = vsel %vm571, %v645, -inf
        %662 = vmax.xlane.f32.xlu0 %v661
        %v663 = vpop.xlane.xlu0 %662
        %v664 = vmax.f32 %v648, %v654
        %v665 = vmax.f32 %v649, %v657
        %v666 = vmax.f32 %v650, %v660
        %v667 = vmax.f32 %v651, %v663
        %v668 = vsub.f32 %v648, %v664
        %v669 = vsub.f32 %v649, %v665
        %v670 = vsub.f32 %v650, %v666
        %v671 = vsub.f32 %v651, %v667
        %v672 = vmul.f32 %v668, 1.442695
        %v673 = vpow.pop %v672
        %v674 = vmul.f32 %v669, 1.442695
        %v675 = vpow.pop %v674
        %v676 = vmul.f32 %v670, 1.442695
        %v677 = vpow.pop %v676
        %v678 = vmul.f32 %v671, 1.442695
        %v679 = vpow.pop %v678
        %681 = vset.pattern.permute.xlu0 0
        %682 = vperm.xlu0 %681, %v664
        %v683 = vpop.permute.xlu0 %682
        %686 = vset.pattern.permute.xlu0 0
        %687 = vperm.xlu0 %686, %v665
        %v688 = vpop.permute.xlu0 %687
        %691 = vset.pattern.permute.xlu0 0
        %692 = vperm.xlu0 %691, %v666
        %v693 = vpop.permute.xlu0 %692
        %696 = vset.pattern.permute.xlu0 0
        %697 = vperm.xlu0 %696, %v667
        %v698 = vpop.permute.xlu0 %697
        %v700 = vsub.f32 %v588, %v683
        %v701 = vsub.f32 %v607, %v688
        %v702 = vsub.f32 %v626, %v693
        %v703 = vsub.f32 %v645, %v698
        %v704 = vmul.f32 %v700, 1.442695
        %v705 = vpow.pop %v704
        %v706 = vmul.f32 %v701, 1.442695
        %v707 = vpow.pop %v706
        %v708 = vmul.f32 %v702, 1.442695
        %v709 = vpow.pop %v708
        %v710 = vmul.f32 %v703, 1.442695
        %v711 = vpow.pop %v710
        %v712 = vld [vmem:[#allocation4] sm:$0xff]
        %v713 = vld [vmem:[#allocation4 + $0x8] sm:$0xff]
        %v714 = vld [vmem:[#allocation4 + $0x10] sm:$0xff]
        %v715 = vld [vmem:[#allocation4 + $0x18] sm:$0xff]
        %v716 = vmul.f32 %v673, %v712
        %v717 = vmul.f32 %v675, %v713
        %v718 = vmul.f32 %v677, %v714
        %v719 = vmul.f32 %v679, %v715
        %v720 = vsel %vm571, %v705, 0.0
        %721 = vadd.xlane.f32.xlu0 %v720
        %v722 = vpop.xlane.xlu0 %721
        %v723 = vsel %vm571, %v707, 0.0
        %724 = vadd.xlane.f32.xlu0 %v723
        %v725 = vpop.xlane.xlu0 %724
        %v726 = vsel %vm571, %v709, 0.0
        %727 = vadd.xlane.f32.xlu0 %v726
        %v728 = vpop.xlane.xlu0 %727
        %v729 = vsel %vm571, %v711, 0.0
        %730 = vadd.xlane.f32.xlu0 %v729
        %v731 = vpop.xlane.xlu0 %730
        %v732 = vadd.f32 %v716, %v722
        %v733 = vadd.f32 %v717, %v725
        %v734 = vadd.f32 %v718, %v728
        %v735 = vadd.f32 %v719, %v731
        %vm736 = vcmask 7168
        %737 = vst.msk [vmem:[#allocation4] sm:$0xff] %vm736, %v732
        %738 = vst.msk [vmem:[#allocation4 + $0x8] sm:$0xff] %vm736, %v733
        %739 = vst.msk [vmem:[#allocation4 + $0x10] sm:$0xff] %vm736, %v734
        %740 = vst.msk [vmem:[#allocation4 + $0x18] sm:$0xff] %vm736, %v735
        %v741 = vld [vmem:[#allocation5] sm:$0xff]
        %v742 = vld [vmem:[#allocation5 + $0x8] sm:$0xff]
        %v743 = vld [vmem:[#allocation5 + $0x10] sm:$0xff]
        %v744 = vld [vmem:[#allocation5 + $0x18] sm:$0xff]
        %746 = vset.pattern.permute.xlu0 0
        %747 = vperm.xlu0 %746, %v673
        %v748 = vpop.permute.xlu0 %747
        %751 = vset.pattern.permute.xlu0 0
        %752 = vperm.xlu0 %751, %v675
        %v753 = vpop.permute.xlu0 %752
        %756 = vset.pattern.permute.xlu0 0
        %757 = vperm.xlu0 %756, %v677
        %v758 = vpop.permute.xlu0 %757
        %761 = vset.pattern.permute.xlu0 0
        %762 = vperm.xlu0 %761, %v679
        %v763 = vpop.permute.xlu0 %762
        %v765 = vmul.f32 %v748, %v741
        %v766 = vmul.f32 %v753, %v742
        %v767 = vmul.f32 %v758, %v743
        %v768 = vmul.f32 %v763, %v744
        %v769 = vpack.c.bf16 %v705, %v705
        %v770 = vpack.c.bf16 %v707, %v707
        %v771 = vpack.c.bf16 %v709, %v709
        %v772 = vpack.c.bf16 %v711, %v711
        %v774 = vsel %vm571, %v769, 0
        %vm776 = vcmask 1043456
        %v778 = vsel %vm776, %v563, 0
        %780 = vmatpush.bf16.msra.mxu0 0
        %781 = vmatpush.bf16.msra.mxu0 0
        %782 = vmatpush.bf16.msra.mxu0 0
        %783 = vmatpush.bf16.msra.mxu0 0
        %784 = vmatpush.bf16.msra.mxu0 0
        %785 = vmatpush.bf16.msra.mxu0 0
        %786 = vmatpush.bf16.msra.mxu0 0
        %787 = vmatpush.bf16.msra.mxu0 %v778
        %788 = vmatmul.bf16.gmra.mxu0 %v774
        %v789 = vpop.f32.mrf.mxu0
        %v790 = vadd.f32 0.0, %v789
        %v791 = vpop.f32.mrf.mxu0
        %792 = vdwg.mxu0
        %v794 = vsel %vm571, %v770, 0
        %v797 = vsel %vm776, %v564, 0
        %799 = vmatpush.bf16.msra.mxu0 0
        %800 = vmatpush.bf16.msra.mxu0 0
        %801 = vmatpush.bf16.msra.mxu0 0
        %802 = vmatpush.bf16.msra.mxu0 0
        %803 = vmatpush.bf16.msra.mxu0 0
        %804 = vmatpush.bf16.msra.mxu0 0
        %805 = vmatpush.bf16.msra.mxu0 0
        %806 = vmatpush.bf16.msra.mxu0 %v797
        %807 = vmatmul.bf16.gmra.mxu0 %v794
        %v808 = vpop.f32.mrf.mxu0
        %v809 = vadd.f32 0.0, %v808
        %v810 = vpop.f32.mrf.mxu0
        %811 = vdwg.mxu0
        %v813 = vsel %vm571, %v771, 0
        %v816 = vsel %vm776, %v565, 0
        %818 = vmatpush.bf16.msra.mxu0 0
        %819 = vmatpush.bf16.msra.mxu0 0
        %820 = vmatpush.bf16.msra.mxu0 0
        %821 = vmatpush.bf16.msra.mxu0 0
        %822 = vmatpush.bf16.msra.mxu0 0
        %823 = vmatpush.bf16.msra.mxu0 0
        %824 = vmatpush.bf16.msra.mxu0 0
        %825 = vmatpush.bf16.msra.mxu0 %v816
        %826 = vmatmul.bf16.gmra.mxu0 %v813
        %v827 = vpop.f32.mrf.mxu0
        %v828 = vadd.f32 0.0, %v827
        %v829 = vpop.f32.mrf.mxu0
        %830 = vdwg.mxu0
        %v832 = vsel %vm571, %v772, 0
        %v835 = vsel %vm776, %v566, 0
        %837 = vmatpush.bf16.msra.mxu0 0
        %838 = vmatpush.bf16.msra.mxu0 0
        %839 = vmatpush.bf16.msra.mxu0 0
        %840 = vmatpush.bf16.msra.mxu0 0
        %841 = vmatpush.bf16.msra.mxu0 0
        %842 = vmatpush.bf16.msra.mxu0 0
        %843 = vmatpush.bf16.msra.mxu0 0
        %844 = vmatpush.bf16.msra.mxu0 %v835
        %845 = vmatmul.bf16.gmra.mxu0 %v832
        %v846 = vpop.f32.mrf.mxu0
        %v847 = vadd.f32 0.0, %v846
        %v848 = vpop.f32.mrf.mxu0
        %849 = vdwg.mxu0
        %v850 = vadd.f32 %v765, %v790
        %v851 = vadd.f32 %v766, %v809
        %v852 = vadd.f32 %v767, %v828
        %v853 = vadd.f32 %v768, %v847
        %854 = vst.msk [vmem:[#allocation5] sm:$0xff] %vm571, %v850
        %855 = vst.msk [vmem:[#allocation5 + $0x8] sm:$0xff] %vm571, %v851
        %856 = vst.msk [vmem:[#allocation5 + $0x10] sm:$0xff] %vm571, %v852
        %857 = vst.msk [vmem:[#allocation5 + $0x18] sm:$0xff] %vm571, %v853
        %858 = vst.msk [vmem:[#allocation3] sm:$0xff] %vm736, %v664
        %859 = vst.msk [vmem:[#allocation3 + $0x8] sm:$0xff] %vm736, %v665
        %860 = vst.msk [vmem:[#allocation3 + $0x10] sm:$0xff] %vm736, %v666
        %861 = vst.msk [vmem:[#allocation3 + $0x18] sm:$0xff] %vm736, %v667
        %p862 = scmp.eq.s32.totalorder %s35, 1
        // Predicated region
        $region73: #{tpu_custom_call.1} parent=43 // pred_check
          %p863 = pneg %p862
        $region74: #{tpu_custom_call.1} parent=43 // pred_check_branch
          %865 = sbr.rel (%p863) target = $region76
        $region75: #{tpu_custom_call.1} parent=43 // pred_region
          %v866 = vld [vmem:[#allocation5] sm:$0xff]
          %v867 = vld [vmem:[#allocation5 + $0x8] sm:$0xff]
          %v868 = vld [vmem:[#allocation5 + $0x10] sm:$0xff]
          %v869 = vld [vmem:[#allocation5 + $0x18] sm:$0xff]
          %v870 = vld [vmem:[#allocation4] sm:$0xff]
          %v871 = vld [vmem:[#allocation4 + $0x8] sm:$0xff]
          %v872 = vld [vmem:[#allocation4 + $0x10] sm:$0xff]
          %v873 = vld [vmem:[#allocation4 + $0x18] sm:$0xff]
          %v874 = vrcp.pop %v870
          %v875 = vrcp.pop %v871
          %v876 = vrcp.pop %v872
          %v877 = vrcp.pop %v873
          %879 = vset.pattern.permute.xlu0 0
          %880 = vperm.xlu0 %879, %v874
          %v881 = vpop.permute.xlu0 %880
          %884 = vset.pattern.permute.xlu0 0
          %885 = vperm.xlu0 %884, %v875
          %v886 = vpop.permute.xlu0 %885
          %889 = vset.pattern.permute.xlu0 0
          %890 = vperm.xlu0 %889, %v876
          %v891 = vpop.permute.xlu0 %890
          %894 = vset.pattern.permute.xlu0 0
          %895 = vperm.xlu0 %894, %v877
          %v896 = vpop.permute.xlu0 %895
          %v898 = vmul.f32 %v866, %v881
          %v899 = vmul.f32 %v867, %v886
          %v900 = vmul.f32 %v868, %v891
          %v901 = vmul.f32 %v869, %v896
          %903 = vrot.lane.b32.xlu0 %v899, 8
          %v904 = vpop.permute.xlu0 %903
          %907 = vrot.lane.b32.xlu0 %v900, 16
          %v908 = vpop.permute.xlu0 %907
          %911 = vrot.lane.b32.xlu0 %v901, 24
          %v912 = vpop.permute.xlu0 %911
          %v914 = vsel %vm571, %v898, %v904
          %vm915 = vcmask 130048
          %v916 = vsel %vm915, %v914, %v908
          %vm917 = vcmask 195584
          %v918 = vsel %vm917, %v916, %v912
          %v919 = vpack.c.bf16 %v918, %v918
          %v920 = vld [vmem:[#allocation15] sm:$0xf]
          %v921 = vld [vmem:[#allocation15 + $0x4] sm:$0xf]
          %v922 = vld [vmem:[#allocation15 + $0x8] sm:$0xf]
          %v923 = vld [vmem:[#allocation15 + $0xc] sm:$0xf]
          %v928 = vunpack.c.l.b16 %v920
          %v929 = vunpack.c.l.b16 %v921
          %v930 = vunpack.c.l.b16 %v922
          %v931 = vunpack.c.l.b16 %v923
          %v932 = vpack.c.b16 %v929, %v928
          %v933 = vpack.c.b16 %v931, %v930
          %v937 = vsel %vm493, %v919, 0
          %939 = vmatpush.bf16.msra.mxu0 0
          %940 = vmatpush.bf16.msra.mxu0 0
          %941 = vmatpush.bf16.msra.mxu0 0
          %942 = vmatpush.bf16.msra.mxu0 0
          %943 = vmatpush.bf16.msra.mxu0 0
          %944 = vmatpush.bf16.msra.mxu0 0
          %945 = vmatpush.bf16.msra.mxu0 %v933
          %946 = vmatpush.bf16.msra.mxu0 %v932
          %947 = vmatmul.bf16.gmra.mxu0 %v937
          %v948 = vpop.f32.mrf.mxu0
          %v949 = vadd.f32 0.0, %v948
          %v950 = vpop.f32.mrf.mxu0
          %951 = vdwg.mxu0
          %952 = vst.msk [vmem:[%s402] sm:$0xff] %vm493, %v949
        $region76: #{tpu_custom_call.1} parent=43 // pred_fallthru
          _
        %s953 = sand.u32 %s197, 1
        %s954 = scalar_lea.sflag [#allocation8], %s953
        %s955 = sand.u32 %s197, 1
        %s956 = smul.addr %s955, 8
        %s957 = scalar_lea.vmem [#allocation17], %s956
        // Predicated region
        $region77: #{tpu_custom_call.1} parent=43 // pred_check
          %p958 = pneg %p207
        $region78: #{tpu_custom_call.1} parent=43 // pred_check_branch
          %960 = sbr.rel (%p958) target = $region80
        $region79: #{tpu_custom_call.1} parent=43 // pred_region
          %962 = vsyncadd %s954, 0
          %s963 = smul.addr %s33, 2
          %s964 = sadd.s32 %s34, %s963
          %s965 = smul.addr %s964, 8
          %s966 = scalar_lea.hbm %s6, %s965
          %s968 = sshll.u32 %s957, 4
          %s969 = int_to_ptr.vmem [resolvable:$true] %s968
          %s970 = sshll.u32 %s966, 4
          %s971 = int_to_ptr.hbm [resolvable:$true] %s970
          %973 = dma.vmem_to_hbm [thread:$0]  %s969, 128, %s971, %s954
        $region80: #{tpu_custom_call.1} parent=43 // pred_fallthru
          _
      $region44: #{tpu_custom_call.1} parent=5 // pred_fallthru
        _
      %p974 = scmp.le.s32.totalorder 2, %s23
      // Predicated region
      $region81: #{tpu_custom_call.1} parent=5 // pred_check
        %p975 = pneg %p974
      $region82: #{tpu_custom_call.1} parent=5 // pred_check_branch
        %977 = sbr.rel (%p975) target = $region84
      $region83: #{tpu_custom_call.1} parent=5 // pred_region
        %s978 = ssub.s32 %s23, 2
        // Predicated region
        $region85: #{tpu_custom_call.1} parent=83 // pred_check
          %p979 = pneg %p213
        $region86: #{tpu_custom_call.1} parent=83 // pred_check_branch
          %981 = sbr.rel (%p979) target = $region88
        $region87: #{tpu_custom_call.1} parent=83 // pred_region
          %s982 = sand.u32 %s198, 1
          %s983 = scalar_lea.sflag [#allocation8], %s982
          %s984 = sand.u32 %s198, 1
          %s985 = smul.addr %s984, 8
          %s986 = scalar_lea.vmem [#allocation17], %s985
          %988 = dma.done %s983, 128
        $region88: #{tpu_custom_call.1} parent=83 // pred_fallthru
          _
      $region84: #{tpu_custom_call.1} parent=5 // pred_fallthru
        _
    $region6: #{tpu_custom_call.1} parent=1 // loop_footer
      %s27 = sadd.s32 1, %s23
    $region7: #{tpu_custom_call.1} parent=1 // loop_footer_branch
      %22 = sbr.rel target = $region3
    $region8: #{tpu_custom_call.1} parent=1 // loop_exit
      _
    %989 = vsyncpa [#allocation7], 1
    %s990 = scalar_lea.sflag [#allocation7], 1
    %991 = vsyncpa %s990, 1
    %992 = vsyncpa [#allocation10], 1
    %s993 = scalar_lea.sflag [#allocation10], 1
    %994 = vsyncpa %s993, 1
    %995 = vsyncpa [#allocation13], 1
    %996 = vsyncpa [#allocation16], 1
    %997 = vsyncpa [#allocation8], 1
    %s998 = scalar_lea.sflag [#allocation8], 1
    %999 = vsyncpa %s998, 1

</llo_original>
